<compile_context>
chip_gen: v5e
topology: v5e:2x2
jax: 0.10.0
libtpu: 0.0.40
codegen_flags: <defaults>
</compile_context>

<pallas_src>
import functools

import jax
import jax.numpy as jnp
from jax.experimental import pallas as pl
from jax.experimental.pallas import tpu as pltpu


_LANES = 128
_SMALL_INPUT_BYTES = 1 << 20  # below this, launch + DMA-descriptor overhead dominates


def _vmem_capacity_bytes() -> int:
    """Generation-aware VMEM capacity (v5e/v6e 128 MiB, v7x 64 MiB per TC)."""
    try:
        return int(pltpu.get_tpu_info().vmem_capacity_bytes)
    except Exception:
        return 64 * 1024 * 1024  # conservative floor (v7x per-TC figure)


_VMEM_CAP_BYTES = _vmem_capacity_bytes()
_VMEM_LIMIT_BYTES = _VMEM_CAP_BYTES // 2      # scoped limit: half of physical
_DEFAULT_BLOCK_BYTES = _VMEM_CAP_BYTES // 16  # per-block budget; <=4x double-buffered


def _sublane_multiple(dtype) -> int:
    """Minimum second-to-last block-dim granularity for this dtype."""
    itemsize = jnp.dtype(dtype).itemsize
    if itemsize >= 4:
        return 8
    return 32 // itemsize  # bf16 -> 16, int8/fp8 -> 32


def _passthrough_kernel(x_ref, o_ref):
    # Placeholder hot path: streaming copy of the current VMEM tile.
    o_ref[...] = x_ref[...]


_CORE_PARALLEL_OK = None


def _core_parallel_supported() -> bool:
    """One-time probe: does this backend accept CORE_PARALLEL grid semantics?

    On v7x this lets the row axis split across both TensorCores (each with its
    own path to HBM); on v5e/v6e it is a no-op.  If the backend rejects it we
    fall back to the portable "parallel" semantics.
    """
    global _CORE_PARALLEL_OK
    if _CORE_PARALLEL_OK is None:
        try:
            probe_in = jnp.arange(16 * _LANES, dtype=jnp.float32).reshape(16, _LANES)
            probe_out = pl.pallas_call(
                _passthrough_kernel,
                out_shape=jax.ShapeDtypeStruct((16, _LANES), jnp.float32),
                grid=(2,),
                in_specs=[pl.BlockSpec((8, _LANES), lambda i: (i, 0))],
                out_specs=pl.BlockSpec((8, _LANES), lambda i: (i, 0)),
                compiler_params=pltpu.CompilerParams(
                    dimension_semantics=(pltpu.CORE_PARALLEL,),
                    vmem_limit_bytes=_VMEM_LIMIT_BYTES,
                ),
            )(probe_in)
            _CORE_PARALLEL_OK = bool(jnp.array_equal(probe_out, probe_in))
        except Exception:
            _CORE_PARALLEL_OK = False
    return _CORE_PARALLEL_OK


@functools.partial(jax.jit, static_argnums=(1, 2), donate_argnums=(0,))
def _tiled_copy(x2, tile_rows, core_parallel):
    """Tiled lane-dense copy; output aliases the (donated) input slab in place."""
    nrows, ncols = x2.shape
    dim_sem = (pltpu.CORE_PARALLEL,) if core_parallel else ("parallel",)
    return pl.pallas_call(
        _passthrough_kernel,
        out_shape=jax.ShapeDtypeStruct((nrows, ncols), x2.dtype),
        grid_spec=pltpu.PrefetchScalarGridSpec(
            num_scalar_prefetch=0,
            grid=(pl.cdiv(nrows, tile_rows),),
            in_specs=[pl.BlockSpec((tile_rows, ncols), lambda i: (i, 0))],
            out_specs=pl.BlockSpec((tile_rows, ncols), lambda i: (i, 0)),
        ),
        input_output_aliases={0: 0},  # in-place: no second HBM slab
        compiler_params=pltpu.CompilerParams(
            dimension_semantics=dim_sem,
            vmem_limit_bytes=_VMEM_LIMIT_BYTES,
        ),
    )(x2)


def pallas_passthrough(x: jax.Array, *, block_bytes: int | None = None) -> jax.Array:
    """Placeholder hot path for a concrete SequentialModel.forward.

    Fast path: since no compute is fused here, tiny / empty inputs are returned
    unchanged (zero HBM traffic, no launch overhead).  Larger inputs exercise
    the tiled, lane-dense Pallas skeleton a concrete subclass would replace
    with real compute: flatten -> pad to a multiple of 128 -> (rows, 128) slab
    -> VMEM-budgeted row tiles -> copy in place -> slice/reshape back.
    """
    if x.size == 0 or x.nbytes < _SMALL_INPUT_BYTES:
        return x

    orig_shape = x.shape
    total = x.size
    itemsize = jnp.dtype(x.dtype).itemsize

    # Lane-dense 2-D slab: always 128 lanes wide (pad the flattened array if
    # needed) so stores are full-width vst, never masked vst.msk.
    pad = (-total) % _LANES
    flat = x.reshape(-1)
    if pad:
        flat = jnp.pad(flat, (0, pad))
    nrows = (total + pad) // _LANES
    x2 = flat.reshape(nrows, _LANES)  # fresh intermediate -> safe to donate

    # Row-tile size from the generation-aware VMEM byte budget (sublane-aligned).
    if block_bytes is None:
        block_bytes = _DEFAULT_BLOCK_BYTES
    sub = _sublane_multiple(x.dtype)
    bytes_per_row = _LANES * itemsize
    budget_rows = max(sub, block_bytes // bytes_per_row)
    if nrows <= budget_rows:
        tile_rows = nrows                           # full extent: always legal
    else:
        tile_rows = max(sub, (budget_rows // sub) * sub)

    out2 = _tiled_copy(x2, int(tile_rows), _core_parallel_supported())

    out_flat = out2.reshape(-1)
    if pad:
        out_flat = out_flat[:total]
    return out_flat.reshape(orig_shape)


class SequentialModel:
    """JAX/Pallas mirror of the abstract PyTorch SequentialModel."""

    def __init__(self):
        # Reference __init__ defines no parameters.
        pass

    def forward(self, batch):
        # Faithful to the reference: abstract method.
        raise NotImplementedError

    def predict(self, batch):
        # Faithful to the reference: abstract method.
        raise NotImplementedError


if __name__ == "__main__":
    key = jax.random.PRNGKey(0)
    batch, seq, hidden = 2, 8, 32
    x_small = jax.random.normal(key, (batch, seq, hidden), dtype=jnp.float32)

    # Abstract-class semantics preserved.
    model = SequentialModel()
    for fn in (model.forward, model.predict):
        try:
            fn(x_small)
            raise AssertionError("abstract method must raise NotImplementedError")
        except NotImplementedError:
            pass

    # 1) Tiny input -> fast path (no pallas_call, identity; zero HBM traffic).
    out_small = pallas_passthrough(x_small)
    jax.block_until_ready(out_small)
    assert out_small.shape == x_small.shape and out_small.dtype == x_small.dtype
    assert bool(jnp.array_equal(out_small, x_small))

    # 2) Lane-dense slab with a forced multi-step grid: 2 MiB f32 -> (4096, 128)
    #    slab, 512-row tiles, 8 grid steps.
    x_big = jax.random.normal(jax.random.PRNGKey(1), (8, 128, 512), dtype=jnp.float32)
    out_big = pallas_passthrough(x_big, block_bytes=256 * 1024)
    jax.block_until_ready(out_big)
    assert out_big.shape == x_big.shape and out_big.dtype == x_big.dtype
    assert bool(jnp.array_equal(out_big, x_big))

    # 3) Lane-sparse element count (total % 128 != 0) -> pad-to-128 path with
    #    the default generation-aware tile (single full-extent block).
    x_odd = jax.random.normal(jax.random.PRNGKey(2), (515, 513), dtype=jnp.float32)
    out_odd = pallas_passthrough(x_odd)
    jax.block_until_ready(out_odd)
    assert out_odd.shape == x_odd.shape and out_odd.dtype == x_odd.dtype
    assert bool(jnp.array_equal(out_odd, x_odd))

    print("KERNEL_OK")
</pallas_src>

<mosaic_0001>
module attributes {stable_mosaic.version = 11 : i64} {
  func.func @_passthrough_kernel(%arg0: i32, %arg1: memref<8x128xf32, #tpu.memory_space<vmem>>, %arg2: memref<8x128xf32, #tpu.memory_space<vmem>>) attributes {dimension_semantics = [#tpu.dimension_semantics<core_parallel>], iteration_bounds = array<i64: 2>, scalar_prefetch = 0 : i64, scratch_operands = 0 : i64, tpu.core_type = #tpu.core_type<tc>, window_params = [{transform_indices = @transform_0, window_bounds = array<i64: 8, 128>}, {transform_indices = @transform_1, window_bounds = array<i64: 8, 128>}]} {
    %c0 = arith.constant 0 : index
    %c0_0 = arith.constant 0 : index
    %0 = vector.load %arg1[%c0, %c0_0] : memref<8x128xf32, #tpu.memory_space<vmem>>, vector<8x128xf32>
    %c0_1 = arith.constant 0 : index
    %c0_2 = arith.constant 0 : index
    %1 = vector.load %arg2[%c0_1, %c0_2] : memref<8x128xf32, #tpu.memory_space<vmem>>, vector<8x128xf32>
    tpu.vector_store %arg2[%c0_1, %c0_2], %0 {strides = array<i32>} : memref<8x128xf32, #tpu.memory_space<vmem>>, vector<8x128xf32>,
    return
  }
  func.func @transform_0(%arg0: i32) -> (i32, i32) {
    %c0_i32 = arith.constant 0 : i32
    %c0_i32_0 = arith.constant 0 : i32
    return %arg0, %c0_i32 : i32, i32
  }
  func.func @transform_1(%arg0: i32) -> (i32, i32) {
    %c0_i32 = arith.constant 0 : i32
    %c0_i32_0 = arith.constant 0 : i32
    return %arg0, %c0_i32 : i32, i32
  }
}

module attributes {stable_mosaic.version = 11 : i64} {
  func.func @_passthrough_kernel(%arg0: i32, %arg1: memref<512x128xf32, #tpu.memory_space<vmem>>, %arg2: memref<512x128xf32, #tpu.memory_space<vmem>>) attributes {dimension_semantics = [#tpu.dimension_semantics<parallel>], iteration_bounds = array<i64: 8>, scalar_prefetch = 0 : i64, scratch_operands = 0 : i64, tpu.core_type = #tpu.core_type<tc>, window_params = [{transform_indices = @transform_0, window_bounds = array<i64: 512, 128>}, {transform_indices = @transform_1, window_bounds = array<i64: 512, 128>}]} {
    %c0 = arith.constant 0 : index
    %c0_0 = arith.constant 0 : index
    %0 = vector.load %arg1[%c0, %c0_0] : memref<512x128xf32, #tpu.memory_space<vmem>>, vector<512x128xf32>
    %c0_1 = arith.constant 0 : index
    %c0_2 = arith.constant 0 : index
    %1 = vector.load %arg2[%c0_1, %c0_2] : memref<512x128xf32, #tpu.memory_space<vmem>>, vector<512x128xf32>
    tpu.vector_store %arg2[%c0_1, %c0_2], %0 {strides = array<i32>} : memref<512x128xf32, #tpu.memory_space<vmem>>, vector<512x128xf32>,
    return
  }
  func.func @transform_0(%arg0: i32) -> (i32, i32) {
    %c0_i32 = arith.constant 0 : i32
    %c0_i32_0 = arith.constant 0 : i32
    return %arg0, %c0_i32 : i32, i32
  }
  func.func @transform_1(%arg0: i32) -> (i32, i32) {
    %c0_i32 = arith.constant 0 : i32
    %c0_i32_0 = arith.constant 0 : i32
    return %arg0, %c0_i32 : i32, i32
  }
}

</mosaic_0001>

<llo_original>
// kernel: _tiled_copy.1
$region0: #{_tiled_copy.1}
  #allocation0 [shape = 'u32[]', space=smem, size = 0x4, offset = 0x4, fixed_abs, tag = 'smem constant byte address 0x4 - core index']
  #allocation1 [shape = 'u32[72,128]{1,0:T(1,128)}', space=vmem, size = 0x9000, scoped, tag = 'internal scratch']
  %s0 = inlined_call_operand.hbm [shape: f32[4096,128], index: 0, kind: input, shape index: {}, may-alias: {0,1}]
  %s1 = inlined_call_operand.hbm [shape: f32[4096,128], index: 1, kind: output, shape index: {}, may-alias: {0,1}]
  %s2 = sld [smem:[#allocation0]]
  $region41: #{_tiled_copy.1} parent=0
    _
  %s4 = ssub.s32 1, %s2
  %s5 = scalar_select 0, %s4, %s2
  $region1: #{_tiled_copy.1} parent=0
    #allocation2 [shape = 'u8[524288]{0}', space=vmem, size = 0x80000, scoped, tag = 'input window, operand 0']
    #allocation3 [shape = 's32[2]{0}', space=sflag, size = 0x8, scoped, tag = 'scoped memory for _tiled_copy.1']
    #allocation4 [shape = 's32[2]{0}', space=sflag, size = 0x8, scoped, tag = 'scoped memory for _tiled_copy.1']
    #allocation5 [shape = 'u8[524288]{0}', space=vmem, size = 0x80000, scoped, tag = 'output window, operand 0']
    %6 = vsyncpa [#allocation3], 0
    %s7 = scalar_lea.sflag [#allocation3], 1
    %8 = vsyncpa %s7, 0
    %9 = vsyncpa [#allocation4], 0
    %s10 = scalar_lea.sflag [#allocation4], 1
    %11 = vsyncpa %s10, 0
    loop: start=0, step=1, limit=10
    $region2: #{_tiled_copy.1} parent=1 // loop_pre_header
      _
    $region3: #{_tiled_copy.1} parent=1 // loop_header
      %s13 = sphi 0, %s17
      %p14 = scmp.ge.s32.totalorder %s13, 10
      %s23 = sphi 0, %s25
      %s26 = sphi 0, %s23
      %s27 = sphi 0, %s26
      %s43 = sphi 0, %s27
      %s49 = sphi 0, %s51
      %s52 = sphi 0, %s49
      %s53 = sphi 0, %s52
      %s69 = sphi 0, %s53
    $region4: #{_tiled_copy.1} parent=1 // loop_header_branch
      %16 = sbr.rel (%p14) target = $region8
    $region5: #{_tiled_copy.1} parent=1 // loop_body
      %s18 = ssub.s32 %s13, 1
      %s19 = ssub.s32 %s13, 2
      %s20 = sadd.s32 %s13, 1
      %s21 = ssub.s32 %s13, %s20
      %p22 = scmp.eq.s32.totalorder %s21, 0
      %s24 = sadd.s32 %s23, 1
      %s25 = scalar_select %p22, %s23, %s24
      %p28 = pneg %p22
      %p29 = scmp.eq.s32.totalorder %s13, 7
      %p30 = por %p28, %p29
      %p31 = scmp.ne.s32.totalorder %s23, %s26
      %p32 = scmp.eq.s32.totalorder %s13, 0
      %p33 = por %p31, %p32
      %p34 = scmp.ne.s32.totalorder %s23, %s26
      %p35 = scmp.eq.s32.totalorder %s18, 7
      %p36 = por %p34, %p35
      %p37 = scmp.ne.s32.totalorder %s26, %s27
      %p38 = scmp.eq.s32.totalorder %s18, 0
      %p39 = por %p37, %p38
      %p40 = scmp.ne.s32.totalorder %s26, %s27
      %p41 = scmp.eq.s32.totalorder %s19, 7
      %p42 = por %p40, %p41
      %p44 = scmp.ne.s32.totalorder %s27, %s43
      %p45 = scmp.eq.s32.totalorder %s19, 0
      %p46 = por %p44, %p45
      %s47 = ssub.s32 %s13, %s20
      %p48 = scmp.eq.s32.totalorder %s47, 0
      %s50 = sadd.s32 %s49, 1
      %s51 = scalar_select %p48, %s49, %s50
      %p54 = pneg %p48
      %p55 = scmp.eq.s32.totalorder %s13, 7
      %p56 = por %p54, %p55
      %p57 = scmp.ne.s32.totalorder %s49, %s52
      %p58 = scmp.eq.s32.totalorder %s13, 0
      %p59 = por %p57, %p58
      %p60 = scmp.ne.s32.totalorder %s49, %s52
      %p61 = scmp.eq.s32.totalorder %s18, 7
      %p62 = por %p60, %p61
      %p63 = scmp.ne.s32.totalorder %s52, %s53
      %p64 = scmp.eq.s32.totalorder %s18, 0
      %p65 = por %p63, %p64
      %p66 = scmp.ne.s32.totalorder %s52, %s53
      %p67 = scmp.eq.s32.totalorder %s19, 7
      %p68 = por %p66, %p67
      %p70 = scmp.ne.s32.totalorder %s53, %s69
      %p71 = scmp.eq.s32.totalorder %s19, 0
      %p72 = por %p70, %p71
      %p73 = scmp.le.s32.totalorder 1, %s13
      %p74 = scmp.lt.s32.totalorder %s13, 9
      %p75 = pnand %p73, %p74
      %p76 = pneg %p75
      // Predicated region
      $region9: #{_tiled_copy.1} parent=5 // pred_check
        _
      $region10: #{_tiled_copy.1} parent=5 // pred_check_branch
        %78 = sbr.rel (%p75) target = $region12
      $region11: #{_tiled_copy.1} parent=5 // pred_region
        %s79 = ssub.s32 %s13, 1
      $region12: #{_tiled_copy.1} parent=5 // pred_fallthru
        _
      %p80 = scmp.lt.s32.totalorder %s13, 8
      // Predicated region
      $region13: #{_tiled_copy.1} parent=5 // pred_check
        %p81 = pneg %p80
      $region14: #{_tiled_copy.1} parent=5 // pred_check_branch
        %83 = sbr.rel (%p81) target = $region16
      $region15: #{_tiled_copy.1} parent=5 // pred_region
        // Predicated region
        $region17: #{_tiled_copy.1} parent=15 // pred_check
          %p84 = pneg %p33
        $region18: #{_tiled_copy.1} parent=15 // pred_check_branch
          %86 = sbr.rel (%p84) target = $region20
        $region19: #{_tiled_copy.1} parent=15 // pred_region
          %s87 = sand.u32 %s23, 1
          %s88 = scalar_lea.sflag [#allocation3], %s87
          %s89 = sand.u32 %s23, 1
          %s90 = smul.addr %s89, 512
          %s91 = scalar_lea.vmem [#allocation2], %s90
          %s92 = smul.u32 64, %s13
          %94 = vsyncadd %s88, 0
          %s95 = smul.addr %s92, 8
          %s96 = scalar_lea.hbm %s0, %s95
          %s97 = sshll.u32 %s96, 4
          %s98 = int_to_ptr.hbm [resolvable:$true] %s97
          %s99 = sshll.u32 %s91, 4
          %s100 = int_to_ptr.vmem [resolvable:$true] %s99
          %105 = dma.hbm_to_vmem [thread:$0]  %s98, 8192, %s100, %s88, 128, 128, 8
        $region20: #{_tiled_copy.1} parent=15 // pred_fallthru
          _
      $region16: #{_tiled_copy.1} parent=5 // pred_fallthru
        _
      %p106 = scmp.le.s32.totalorder 1, %s13
      %p107 = scmp.lt.s32.totalorder %s13, 9
      %p108 = pnand %p106, %p107
      %p109 = pneg %p108
      // Predicated region
      $region21: #{_tiled_copy.1} parent=5 // pred_check
        _
      $region22: #{_tiled_copy.1} parent=5 // pred_check_branch
        %111 = sbr.rel (%p108) target = $region24
      $region23: #{_tiled_copy.1} parent=5 // pred_region
        %s112 = ssub.s32 %s13, 1
        %s113 = sand.u32 %s26, 1
        %s114 = scalar_lea.sflag [#allocation3], %s113
        %s115 = sand.u32 %s26, 1
        %s116 = smul.addr %s115, 512
        %s117 = scalar_lea.vmem [#allocation2], %s116
        // Predicated region
        $region25: #{_tiled_copy.1} parent=23 // pred_check
          %p118 = pneg %p39
        $region26: #{_tiled_copy.1} parent=23 // pred_check_branch
          %120 = sbr.rel (%p118) target = $region28
        $region27: #{_tiled_copy.1} parent=23 // pred_region
          %122 = dma.done %s114, 8192
        $region28: #{_tiled_copy.1} parent=23 // pred_fallthru
          _
        %s123 = sand.u32 %s26, 1
        %s124 = scalar_lea.sflag [#allocation3], %s123
        %s125 = sand.u32 %s26, 1
        %s126 = smul.addr %s125, 512
        %s127 = scalar_lea.vmem [#allocation2], %s126
        %p128 = pneg %p39
        %p129 = pneg %p36
        %p130 = pneg %p65
        %p131 = pneg %p62
        %s132 = sand.u32 %s52, 1
        %s133 = scalar_lea.sflag [#allocation4], %s132
        %s134 = sand.u32 %s52, 1
        %s135 = smul.addr %s134, 512
        %s136 = scalar_lea.vmem [#allocation5], %s135
        %s137 = smul.u32 64, %s18
        %s138 = smul.u32 64, %s18
        %v139 = vld [vmem:[%s117] sm:$0xff]
        %v140 = vld [vmem:[%s117 + $0x8] sm:$0xff]
        %v141 = vld [vmem:[%s117 + $0x10] sm:$0xff]
        %v142 = vld [vmem:[%s117 + $0x18] sm:$0xff]
        %v143 = vld [vmem:[%s117 + $0x20] sm:$0xff]
        %v144 = vld [vmem:[%s117 + $0x28] sm:$0xff]
        %v145 = vld [vmem:[%s117 + $0x30] sm:$0xff]
        %v146 = vld [vmem:[%s117 + $0x38] sm:$0xff]
        %v147 = vld [vmem:[%s117 + $0x40] sm:$0xff]
        %v148 = vld [vmem:[%s117 + $0x48] sm:$0xff]
        %v149 = vld [vmem:[%s117 + $0x50] sm:$0xff]
        %v150 = vld [vmem:[%s117 + $0x58] sm:$0xff]
        %v151 = vld [vmem:[%s117 + $0x60] sm:$0xff]
        %v152 = vld [vmem:[%s117 + $0x68] sm:$0xff]
        %v153 = vld [vmem:[%s117 + $0x70] sm:$0xff]
        %v154 = vld [vmem:[%s117 + $0x78] sm:$0xff]
        %v155 = vld [vmem:[%s117 + $0x80] sm:$0xff]
        %v156 = vld [vmem:[%s117 + $0x88] sm:$0xff]
        %v157 = vld [vmem:[%s117 + $0x90] sm:$0xff]
        %v158 = vld [vmem:[%s117 + $0x98] sm:$0xff]
        %v159 = vld [vmem:[%s117 + $0xa0] sm:$0xff]
        %v160 = vld [vmem:[%s117 + $0xa8] sm:$0xff]
        %v161 = vld [vmem:[%s117 + $0xb0] sm:$0xff]
        %v162 = vld [vmem:[%s117 + $0xb8] sm:$0xff]
        %v163 = vld [vmem:[%s117 + $0xc0] sm:$0xff]
        %v164 = vld [vmem:[%s117 + $0xc8] sm:$0xff]
        %v165 = vld [vmem:[%s117 + $0xd0] sm:$0xff]
        %v166 = vld [vmem:[%s117 + $0xd8] sm:$0xff]
        %v167 = vld [vmem:[%s117 + $0xe0] sm:$0xff]
        %v168 = vld [vmem:[%s117 + $0xe8] sm:$0xff]
        %v169 = vld [vmem:[%s117 + $0xf0] sm:$0xff]
        %v170 = vld [vmem:[%s117 + $0xf8] sm:$0xff]
        %v171 = vld [vmem:[%s117 + $0x100] sm:$0xff]
        %v172 = vld [vmem:[%s117 + $0x108] sm:$0xff]
        %v173 = vld [vmem:[%s117 + $0x110] sm:$0xff]
        %v174 = vld [vmem:[%s117 + $0x118] sm:$0xff]
        %v175 = vld [vmem:[%s117 + $0x120] sm:$0xff]
        %v176 = vld [vmem:[%s117 + $0x128] sm:$0xff]
        %v177 = vld [vmem:[%s117 + $0x130] sm:$0xff]
        %v178 = vld [vmem:[%s117 + $0x138] sm:$0xff]
        %v179 = vld [vmem:[%s117 + $0x140] sm:$0xff]
        %v180 = vld [vmem:[%s117 + $0x148] sm:$0xff]
        %v181 = vld [vmem:[%s117 + $0x150] sm:$0xff]
        %v182 = vld [vmem:[%s117 + $0x158] sm:$0xff]
        %v183 = vld [vmem:[%s117 + $0x160] sm:$0xff]
        %v184 = vld [vmem:[%s117 + $0x168] sm:$0xff]
        %v185 = vld [vmem:[%s117 + $0x170] sm:$0xff]
        %v186 = vld [vmem:[%s117 + $0x178] sm:$0xff]
        %v187 = vld [vmem:[%s117 + $0x180] sm:$0xff]
        %v188 = vld [vmem:[%s117 + $0x188] sm:$0xff]
        %v189 = vld [vmem:[%s117 + $0x190] sm:$0xff]
        %v190 = vld [vmem:[%s117 + $0x198] sm:$0xff]
        %v191 = vld [vmem:[%s117 + $0x1a0] sm:$0xff]
        %v192 = vld [vmem:[%s117 + $0x1a8] sm:$0xff]
        %v193 = vld [vmem:[%s117 + $0x1b0] sm:$0xff]
        %v194 = vld [vmem:[%s117 + $0x1b8] sm:$0xff]
        %v195 = vld [vmem:[%s117 + $0x1c0] sm:$0xff]
        %v196 = vld [vmem:[%s117 + $0x1c8] sm:$0xff]
        %v197 = vld [vmem:[%s117 + $0x1d0] sm:$0xff]
        %v198 = vld [vmem:[%s117 + $0x1d8] sm:$0xff]
        %v199 = vld [vmem:[%s117 + $0x1e0] sm:$0xff]
        %v200 = vld [vmem:[%s117 + $0x1e8] sm:$0xff]
        %v201 = vld [vmem:[%s117 + $0x1f0] sm:$0xff]
        %v202 = vld [vmem:[%s117 + $0x1f8] sm:$0xff]
        %203 = vst [vmem:[%s136] sm:$0xff] %v139
        %204 = vst [vmem:[%s136 + $0x8] sm:$0xff] %v140
        %205 = vst [vmem:[%s136 + $0x10] sm:$0xff] %v141
        %206 = vst [vmem:[%s136 + $0x18] sm:$0xff] %v142
        %207 = vst [vmem:[%s136 + $0x20] sm:$0xff] %v143
        %208 = vst [vmem:[%s136 + $0x28] sm:$0xff] %v144
        %209 = vst [vmem:[%s136 + $0x30] sm:$0xff] %v145
        %210 = vst [vmem:[%s136 + $0x38] sm:$0xff] %v146
        %211 = vst [vmem:[%s136 + $0x40] sm:$0xff] %v147
        %212 = vst [vmem:[%s136 + $0x48] sm:$0xff] %v148
        %213 = vst [vmem:[%s136 + $0x50] sm:$0xff] %v149
        %214 = vst [vmem:[%s136 + $0x58] sm:$0xff] %v150
        %215 = vst [vmem:[%s136 + $0x60] sm:$0xff] %v151
        %216 = vst [vmem:[%s136 + $0x68] sm:$0xff] %v152
        %217 = vst [vmem:[%s136 + $0x70] sm:$0xff] %v153
        %218 = vst [vmem:[%s136 + $0x78] sm:$0xff] %v154
        %219 = vst [vmem:[%s136 + $0x80] sm:$0xff] %v155
        %220 = vst [vmem:[%s136 + $0x88] sm:$0xff] %v156
        %221 = vst [vmem:[%s136 + $0x90] sm:$0xff] %v157
        %222 = vst [vmem:[%s136 + $0x98] sm:$0xff] %v158
        %223 = vst [vmem:[%s136 + $0xa0] sm:$0xff] %v159
        %224 = vst [vmem:[%s136 + $0xa8] sm:$0xff] %v160
        %225 = vst [vmem:[%s136 + $0xb0] sm:$0xff] %v161
        %226 = vst [vmem:[%s136 + $0xb8] sm:$0xff] %v162
        %227 = vst [vmem:[%s136 + $0xc0] sm:$0xff] %v163
        %228 = vst [vmem:[%s136 + $0xc8] sm:$0xff] %v164
        %229 = vst [vmem:[%s136 + $0xd0] sm:$0xff] %v165
        %230 = vst [vmem:[%s136 + $0xd8] sm:$0xff] %v166
        %231 = vst [vmem:[%s136 + $0xe0] sm:$0xff] %v167
        %232 = vst [vmem:[%s136 + $0xe8] sm:$0xff] %v168
        %233 = vst [vmem:[%s136 + $0xf0] sm:$0xff] %v169
        %234 = vst [vmem:[%s136 + $0xf8] sm:$0xff] %v170
        %235 = vst [vmem:[%s136 + $0x100] sm:$0xff] %v171
        %236 = vst [vmem:[%s136 + $0x108] sm:$0xff] %v172
        %237 = vst [vmem:[%s136 + $0x110] sm:$0xff] %v173
        %238 = vst [vmem:[%s136 + $0x118] sm:$0xff] %v174
        %239 = vst [vmem:[%s136 + $0x120] sm:$0xff] %v175
        %240 = vst [vmem:[%s136 + $0x128] sm:$0xff] %v176
        %241 = vst [vmem:[%s136 + $0x130] sm:$0xff] %v177
        %242 = vst [vmem:[%s136 + $0x138] sm:$0xff] %v178
        %243 = vst [vmem:[%s136 + $0x140] sm:$0xff] %v179
        %244 = vst [vmem:[%s136 + $0x148] sm:$0xff] %v180
        %245 = vst [vmem:[%s136 + $0x150] sm:$0xff] %v181
        %246 = vst [vmem:[%s136 + $0x158] sm:$0xff] %v182
        %247 = vst [vmem:[%s136 + $0x160] sm:$0xff] %v183
        %248 = vst [vmem:[%s136 + $0x168] sm:$0xff] %v184
        %249 = vst [vmem:[%s136 + $0x170] sm:$0xff] %v185
        %250 = vst [vmem:[%s136 + $0x178] sm:$0xff] %v186
        %251 = vst [vmem:[%s136 + $0x180] sm:$0xff] %v187
        %252 = vst [vmem:[%s136 + $0x188] sm:$0xff] %v188
        %253 = vst [vmem:[%s136 + $0x190] sm:$0xff] %v189
        %254 = vst [vmem:[%s136 + $0x198] sm:$0xff] %v190
        %255 = vst [vmem:[%s136 + $0x1a0] sm:$0xff] %v191
        %256 = vst [vmem:[%s136 + $0x1a8] sm:$0xff] %v192
        %257 = vst [vmem:[%s136 + $0x1b0] sm:$0xff] %v193
        %258 = vst [vmem:[%s136 + $0x1b8] sm:$0xff] %v194
        %259 = vst [vmem:[%s136 + $0x1c0] sm:$0xff] %v195
        %260 = vst [vmem:[%s136 + $0x1c8] sm:$0xff] %v196
        %261 = vst [vmem:[%s136 + $0x1d0] sm:$0xff] %v197
        %262 = vst [vmem:[%s136 + $0x1d8] sm:$0xff] %v198
        %263 = vst [vmem:[%s136 + $0x1e0] sm:$0xff] %v199
        %264 = vst [vmem:[%s136 + $0x1e8] sm:$0xff] %v200
        %265 = vst [vmem:[%s136 + $0x1f0] sm:$0xff] %v201
        %266 = vst [vmem:[%s136 + $0x1f8] sm:$0xff] %v202
        %s267 = sand.u32 %s52, 1
        %s268 = scalar_lea.sflag [#allocation4], %s267
        %s269 = sand.u32 %s52, 1
        %s270 = smul.addr %s269, 512
        %s271 = scalar_lea.vmem [#allocation5], %s270
        // Predicated region
        $region29: #{_tiled_copy.1} parent=23 // pred_check
          %p272 = pneg %p62
        $region30: #{_tiled_copy.1} parent=23 // pred_check_branch
          %274 = sbr.rel (%p272) target = $region32
        $region31: #{_tiled_copy.1} parent=23 // pred_region
          %s275 = smul.u32 64, %s18
          %277 = vsyncadd %s268, 0
          %s278 = smul.addr %s275, 8
          %s279 = scalar_lea.hbm %s1, %s278
          %s280 = sshll.u32 %s271, 4
          %s281 = int_to_ptr.vmem [resolvable:$true] %s280
          %s282 = sshll.u32 %s279, 4
          %s283 = int_to_ptr.hbm [resolvable:$true] %s282
          %288 = dma.vmem_to_hbm [thread:$0]  %s281, 8192, %s283, %s268, 128, 128, 8
        $region32: #{_tiled_copy.1} parent=23 // pred_fallthru
          _
      $region24: #{_tiled_copy.1} parent=5 // pred_fallthru
        _
      %p289 = scmp.le.s32.totalorder 2, %s13
      // Predicated region
      $region33: #{_tiled_copy.1} parent=5 // pred_check
        %p290 = pneg %p289
      $region34: #{_tiled_copy.1} parent=5 // pred_check_branch
        %292 = sbr.rel (%p290) target = $region36
      $region35: #{_tiled_copy.1} parent=5 // pred_region
        %s293 = ssub.s32 %s13, 2
        // Predicated region
        $region37: #{_tiled_copy.1} parent=35 // pred_check
          %p294 = pneg %p68
        $region38: #{_tiled_copy.1} parent=35 // pred_check_branch
          %296 = sbr.rel (%p294) target = $region40
        $region39: #{_tiled_copy.1} parent=35 // pred_region
          %s297 = sand.u32 %s53, 1
          %s298 = scalar_lea.sflag [#allocation4], %s297
          %s299 = sand.u32 %s53, 1
          %s300 = smul.addr %s299, 512
          %s301 = scalar_lea.vmem [#allocation5], %s300
          %303 = dma.done %s298, 8192
        $region40: #{_tiled_copy.1} parent=35 // pred_fallthru
          _
      $region36: #{_tiled_copy.1} parent=5 // pred_fallthru
        _
    $region6: #{_tiled_copy.1} parent=1 // loop_footer
      %s17 = sadd.s32 1, %s13
    $region7: #{_tiled_copy.1} parent=1 // loop_footer_branch
      %12 = sbr.rel target = $region3
    $region8: #{_tiled_copy.1} parent=1 // loop_exit
      _
    %304 = vsyncpa [#allocation3], 1
    %s305 = scalar_lea.sflag [#allocation3], 1
    %306 = vsyncpa %s305, 1
    %307 = vsyncpa [#allocation4], 1
    %s308 = scalar_lea.sflag [#allocation4], 1
    %309 = vsyncpa %s308, 1

</llo_original>
